<compile_context>
chip_gen: v5e
topology: v5e:2x2
jax: 0.10.0
libtpu: 0.0.40
codegen_flags: <defaults>
</compile_context>

<pallas_src>
import jax
import jax.numpy as jnp
from jax import lax
from jax.experimental import pallas as pl
from jax.experimental.pallas import tpu as pltpu

LN_EPS = 1e-12                 # BERT default layer_norm_eps
INV_SQRT2 = 0.7071067811865476
MATMUL_DTYPE = jnp.bfloat16    # MXU operand dtype


# --------------------------------------------------------------------------
# Budget / tiling helpers
# --------------------------------------------------------------------------
def _round_up(x, m):
    return (x + m - 1) // m * m


def _vmem_capacity_bytes():
    try:
        return int(pltpu.get_tpu_info().vmem_capacity_bytes)
    except Exception:
        return 64 << 20          # conservative: v7x per-TC VMEM


def _vmem_budget_bytes():
    # 80% of physical VMEM: ~51 MiB on v7x, ~102 MiB on v5e/v6e.
    return max(int(_vmem_capacity_bytes() * 0.8), 32 << 20)


def _default_tn():
    # Generation-aware decoder N tile: 4096 where 128 MiB VMEM is available
    # (v5e/v6e), 2048 on v7x (64 MiB).
    return 4096 if _vmem_capacity_bytes() >= (96 << 20) else 2048


def _pick_tile(dim, target, align):
    """Return (tile, padded_dim): either tile == padded_dim (full-extent
    block, no alignment constraint) or tile is a multiple of `align` that
    divides padded_dim exactly."""
    if dim <= target:
        return dim, dim
    tile = max(align, (target // align) * align)
    return tile, _round_up(dim, tile)


def _fit_decoder_tn(tm, H, tn, mm_bytes, out_bytes, budget):
    """Shrink the requested decoder N tile (multiple of 128) until its
    double-buffered working set fits the VMEM budget."""
    def need(t):
        return int((2 * tm * H * mm_bytes      # activation tile (x2 buffers)
                    + 2 * H * t * mm_bytes     # weight tile
                    + 2 * 8 * t * 4            # bias row
                    + 2 * tm * t * out_bytes   # output tile
                    ) * 1.3) + (2 << 20)
    t = max(128, (tn // 128) * 128)
    while t > 128 and need(t) > budget:
        t -= 128
    return t


def _resident_spec(shape, index_map):
    # Constant-index blocks are fetched once; single-buffer them to save VMEM.
    try:
        return pl.BlockSpec(shape, index_map, pipeline_mode=pl.Buffered(1))
    except (AttributeError, TypeError):
        return pl.BlockSpec(shape, index_map)


# --------------------------------------------------------------------------
# Shared f32 epilogue: bias + exact GELU + LayerNorm (one-pass moments)
# --------------------------------------------------------------------------
def _transform_epilogue(h, b1, gamma, beta):
    h = h + b1.astype(jnp.float32)
    # exact (erf-based) GELU, matching torch.nn.functional.gelu default
    h = 0.5 * h * (1.0 + lax.erf(h * jnp.float32(INV_SQRT2)))
    # LayerNorm over hidden axis; single pass: var = E[h^2] - mu^2
    mu = jnp.mean(h, axis=-1, keepdims=True)
    msq = jnp.mean(h * h, axis=-1, keepdims=True)
    var = jnp.maximum(msq - mu * mu, 0.0)
    hn = (h - mu) * lax.rsqrt(var + LN_EPS)
    return hn * gamma.astype(jnp.float32) + beta.astype(jnp.float32)


# --------------------------------------------------------------------------
# Kernel 1: BertPredictionHeadTransform
# --------------------------------------------------------------------------
def transform_kernel(x_ref, w_ref, b_ref, g_ref, beta_ref, o_ref):
    h = jnp.dot(x_ref[...], w_ref[...], preferred_element_type=jnp.float32)
    y = _transform_epilogue(h, b_ref[...], g_ref[...], beta_ref[...])
    o_ref[...] = y.astype(o_ref.dtype)


# --------------------------------------------------------------------------
# Kernel 2: decoder   logits = h @ Wd + bias
# --------------------------------------------------------------------------
def decoder_kernel(h_ref, wd_ref, bias_ref, o_ref):
    acc = jnp.dot(h_ref[...], wd_ref[...], preferred_element_type=jnp.float32)
    o_ref[...] = (acc + bias_ref[...].astype(jnp.float32)).astype(o_ref.dtype)


# --------------------------------------------------------------------------
# Kernel 3: fused transform + decoder for the small-M regime
#   (one M tile; h is cached in VMEM scratch and swept against V tiles)
# --------------------------------------------------------------------------
def fused_kernel(x_ref, w1_ref, b1_ref, g_ref, beta_ref, wd_ref, bias_ref,
                 o_ref, h_scratch):
    @pl.when(pl.program_id(0) == 0)
    def _():
        h = jnp.dot(x_ref[...], w1_ref[...], preferred_element_type=jnp.float32)
        y = _transform_epilogue(h, b1_ref[...], g_ref[...], beta_ref[...])
        h_scratch[...] = y.astype(h_scratch.dtype)

    acc = jnp.dot(h_scratch[...], wd_ref[...], preferred_element_type=jnp.float32)
    o_ref[...] = (acc + bias_ref[...].astype(jnp.float32)).astype(o_ref.dtype)


# --------------------------------------------------------------------------
# pallas_call wrappers
# --------------------------------------------------------------------------
def mlm_head_transform(x2d, w1, b1, gamma, beta, *, tm, out_dtype):
    M, H = x2d.shape
    assert M % tm == 0, (M, tm)
    mm_b = x2d.dtype.itemsize
    w_b = w1.dtype.itemsize
    out_b = jnp.dtype(out_dtype).itemsize
    need = int((2 * tm * H * mm_b + H * H * w_b + 3 * 8 * H * 4
                + 2 * tm * H * out_b) * 1.3) + (2 << 20)
    vmem = int(min(max(need, 32 << 20), _vmem_budget_bytes()))
    cost = pl.CostEstimate(
        flops=int(2 * M * H * H + 12 * M * H),
        transcendentals=int(M * H),
        bytes_accessed=int(M * H * mm_b + H * H * w_b + 3 * H * 4
                           + M * H * out_b))
    return pl.pallas_call(
        transform_kernel,
        out_shape=jax.ShapeDtypeStruct((M, H), out_dtype),
        grid_spec=pltpu.PrefetchScalarGridSpec(
            num_scalar_prefetch=0,
            grid=(M // tm,),
            in_specs=[
                pl.BlockSpec((tm, H), lambda i: (i, 0)),
                _resident_spec((H, H), lambda i: (0, 0)),   # resident weight
                _resident_spec((1, H), lambda i: (0, 0)),
                _resident_spec((1, H), lambda i: (0, 0)),
                _resident_spec((1, H), lambda i: (0, 0)),
            ],
            out_specs=pl.BlockSpec((tm, H), lambda i: (i, 0)),
        ),
        compiler_params=pltpu.CompilerParams(
            dimension_semantics=("parallel",),
            vmem_limit_bytes=vmem),
        cost_estimate=cost,
    )(x2d, w1, b1, gamma, beta)


def mlm_head_decoder(h2d, wd, bias, *, tm, tn, out_dtype):
    M, H = h2d.shape
    V = wd.shape[1]
    assert M % tm == 0 and V % tn == 0, (M, tm, V, tn)
    mm_b = h2d.dtype.itemsize
    w_b = wd.dtype.itemsize
    out_b = jnp.dtype(out_dtype).itemsize
    need = int((2 * tm * H * mm_b + 2 * H * tn * w_b + 2 * 8 * tn * 4
                + 2 * tm * tn * out_b) * 1.3) + (2 << 20)
    vmem = int(min(max(need, 32 << 20), _vmem_budget_bytes()))
    n_restream = V // tn
    cost = pl.CostEstimate(
        flops=int(2 * M * H * V + M * V),
        transcendentals=0,
        bytes_accessed=int(M * H * n_restream * mm_b + H * V * w_b + V * 4
                           + M * V * out_b))
    # Grid order: V tiles outermost, M tiles innermost -> the H x tn decoder
    # weight block is resident across the inner M sweep; only the (smaller,
    # bf16) activation tiles re-stream.  Both axes are independent.
    return pl.pallas_call(
        decoder_kernel,
        out_shape=jax.ShapeDtypeStruct((M, V), out_dtype),
        grid_spec=pltpu.PrefetchScalarGridSpec(
            num_scalar_prefetch=0,
            grid=(V // tn, M // tm),
            in_specs=[
                pl.BlockSpec((tm, H), lambda j, i: (i, 0)),
                pl.BlockSpec((H, tn), lambda j, i: (0, j)),
                pl.BlockSpec((1, tn), lambda j, i: (0, j)),
            ],
            out_specs=pl.BlockSpec((tm, tn), lambda j, i: (i, j)),
        ),
        compiler_params=pltpu.CompilerParams(
            dimension_semantics=("parallel", "parallel"),
            vmem_limit_bytes=vmem),
        cost_estimate=cost,
    )(h2d, wd, bias)


def mlm_head_fused(x2d, w1, b1, gamma, beta, wd, bias, *, tn, out_dtype):
    M, H = x2d.shape
    V = wd.shape[1]
    assert V % tn == 0, (V, tn)
    mm_dtype = x2d.dtype
    mm_b = mm_dtype.itemsize
    out_b = jnp.dtype(out_dtype).itemsize
    need = int((M * H * mm_b + H * H * w1.dtype.itemsize + 3 * 8 * H * 4
                + 2 * H * tn * wd.dtype.itemsize + 2 * 8 * tn * 4
                + 2 * M * tn * out_b + M * H * mm_b) * 1.3) + (2 << 20)
    vmem = int(min(max(need, 32 << 20), _vmem_budget_bytes()))
    cost = pl.CostEstimate(
        flops=int(2 * M * H * H + 12 * M * H + 2 * M * H * V + M * V),
        transcendentals=int(M * H),
        bytes_accessed=int(M * H * mm_b + H * H * w1.dtype.itemsize + 3 * H * 4
                           + H * V * wd.dtype.itemsize + V * 4
                           + M * V * out_b))
    return pl.pallas_call(
        fused_kernel,
        out_shape=jax.ShapeDtypeStruct((M, V), out_dtype),
        grid_spec=pltpu.PrefetchScalarGridSpec(
            num_scalar_prefetch=0,
            grid=(V // tn,),
            in_specs=[
                _resident_spec((M, H), lambda j: (0, 0)),
                _resident_spec((H, H), lambda j: (0, 0)),
                _resident_spec((1, H), lambda j: (0, 0)),
                _resident_spec((1, H), lambda j: (0, 0)),
                _resident_spec((1, H), lambda j: (0, 0)),
                pl.BlockSpec((H, tn), lambda j: (0, j)),
                pl.BlockSpec((1, tn), lambda j: (0, j)),
            ],
            out_specs=pl.BlockSpec((M, tn), lambda j: (0, j)),
            scratch_shapes=[pltpu.VMEM((M, H), mm_dtype)],
        ),
        compiler_params=pltpu.CompilerParams(
            # scratch-carried h across the V sweep -> not megacore-splittable
            dimension_semantics=("arbitrary",),
            vmem_limit_bytes=vmem),
        cost_estimate=cost,
    )(x2d, w1, b1, gamma, beta, wd, bias)


# --------------------------------------------------------------------------
# One-time parameter preparation (hoisted out of the per-call path)
# --------------------------------------------------------------------------
def prepare_params(raw, *, matmul_dtype=MATMUL_DTYPE, tn=None):
    """Cast matmul weights to the MXU operand dtype and pre-pad the vocab
    axis once, so no per-call jnp.pad of the (H, V) decoder weight."""
    if tn is None:
        tn = _default_tn()
    tn = max(128, (int(tn) // 128) * 128)
    w1 = raw["w1"].astype(matmul_dtype)
    wd = raw["wd"].astype(matmul_dtype)
    bias = raw["bias"].astype(jnp.float32).reshape(1, -1)
    V = wd.shape[1]
    Vp = V if V <= tn else _round_up(V, tn)
    if Vp != V:
        wd = jnp.pad(wd, ((0, 0), (0, Vp - V)))
        bias = jnp.pad(bias, ((0, 0), (0, Vp - V)))
    return {
        "w1": w1,
        "b1": raw["b1"].astype(jnp.float32).reshape(1, -1),
        "gamma": raw["gamma"].astype(jnp.float32).reshape(1, -1),
        "beta": raw["beta"].astype(jnp.float32).reshape(1, -1),
        "wd": wd,
        "bias": bias,
        "vocab_size": int(V),
    }


# --------------------------------------------------------------------------
# Forward: (batch, seq, hidden) -> (batch, seq, vocab)
# --------------------------------------------------------------------------
def mlm_head_forward(x, params, *, tm=512, tn=None, logits_dtype=None):
    B, S, H = x.shape
    w1, b1 = params["w1"], params["b1"]
    gamma, beta = params["gamma"], params["beta"]
    wd, bias = params["wd"], params["bias"]
    Vp = wd.shape[1]
    V = int(params.get("vocab_size", Vp))
    out_dtype = jnp.dtype(logits_dtype) if logits_dtype is not None else x.dtype
    mm_dtype = jnp.dtype(w1.dtype)
    mm_b, out_b = mm_dtype.itemsize, jnp.dtype(out_dtype).itemsize
    if tn is None:
        tn = _default_tn()

    M = B * S
    x2d = x.reshape(M, H).astype(mm_dtype)   # bf16 MXU operands

    # sub-32-bit operands pack 16 rows per sublane tile
    sub_align = 16 if mm_b < 4 else 8
    tm_eff, m_pad = _pick_tile(M, tm, sub_align)

    budget = _vmem_budget_bytes()
    tn_fit = _fit_decoder_tn(tm_eff, H, tn, mm_b, out_b, budget)
    tn_eff, v_pad = _pick_tile(Vp, tn_fit, 128)
    if v_pad != Vp:
        # Only hit when the requested tn does not divide the prepared vocab
        # width (prepare_params with the same tn avoids this per-call pad).
        wd = jnp.pad(wd, ((0, 0), (0, v_pad - Vp)))
        bias = jnp.pad(bias, ((0, 0), (0, v_pad - Vp)))

    if M <= tm_eff:
        # Small-M fast path: single M tile -> fuse transform + decoder; h
        # stays in VMEM scratch, decoder weight is read exactly once.
        logits2d = mlm_head_fused(x2d, w1, b1, gamma, beta, wd, bias,
                                  tn=tn_eff, out_dtype=out_dtype)
        return logits2d[:M, :V].reshape(B, S, V)

    if m_pad != M:
        x2d = jnp.pad(x2d, ((0, m_pad - M), (0, 0)))

    # h kept in bf16 to halve the restreamed / written activation bytes.
    h2d = mlm_head_transform(x2d, w1, b1, gamma, beta,
                             tm=tm_eff, out_dtype=mm_dtype)
    logits2d = mlm_head_decoder(h2d, wd, bias, tm=tm_eff, tn=tn_eff,
                                out_dtype=out_dtype)
    return logits2d[:M, :V].reshape(B, S, V)


# --------------------------------------------------------------------------
# Pure-JAX reference mirroring the kernel numerics (bf16 operands, f32 acc)
# --------------------------------------------------------------------------
def mlm_head_reference(x, raw, *, matmul_dtype=MATMUL_DTYPE):
    f32 = jnp.float32
    h = jnp.dot(x.astype(matmul_dtype), raw["w1"].astype(matmul_dtype),
                preferred_element_type=f32)
    h = h + raw["b1"].astype(f32)
    h = 0.5 * h * (1.0 + lax.erf(h * jnp.float32(INV_SQRT2)))
    mu = jnp.mean(h, axis=-1, keepdims=True)
    var = jnp.mean((h - mu) ** 2, axis=-1, keepdims=True)
    h = (h - mu) * lax.rsqrt(var + LN_EPS)
    h = h * raw["gamma"].astype(f32) + raw["beta"].astype(f32)
    h = h.astype(matmul_dtype)
    logits = jnp.dot(h, raw["wd"].astype(matmul_dtype),
                     preferred_element_type=f32)
    return logits + raw["bias"].astype(f32)


if __name__ == "__main__":
    # Small config implied by the module: hidden_size=32, vocab_size=256
    B, S, H, V = 2, 8, 32, 256

    key = jax.random.PRNGKey(0)
    kx, kw1, kb1, kg, kbe, kwd, kbi, kx2 = jax.random.split(key, 8)

    x = jax.random.normal(kx, (B, S, H), dtype=jnp.float32)

    # Raw (torch-like) parameters; Linear weights stored pre-transposed.
    raw = {
        "w1": jax.random.normal(kw1, (H, H), dtype=jnp.float32) * 0.05,
        "b1": jax.random.normal(kb1, (H,), dtype=jnp.float32) * 0.01,
        "gamma": 1.0 + 0.1 * jax.random.normal(kg, (H,), dtype=jnp.float32),
        "beta": 0.1 * jax.random.normal(kbe, (H,), dtype=jnp.float32),
        "wd": jax.random.normal(kwd, (H, V), dtype=jnp.float32) * 0.05,
        "bias": 0.02 * jax.random.normal(kbi, (V,), dtype=jnp.float32),
    }
    params = prepare_params(raw)   # one-time: bf16 weights + vocab padding

    # --- Path 1: small-M fused kernel (single M tile, resident weights) ---
    out = jax.block_until_ready(mlm_head_forward(x, params))
    ref = mlm_head_reference(x, raw)
    assert out.shape == (B, S, V), out.shape
    assert out.dtype == x.dtype, out.dtype
    err = float(jnp.max(jnp.abs(out - ref)))
    assert err < 5e-3, err

    # --- Path 2: two-kernel path (multi M tiles, multi V tiles, padded M) ---
    B2, S2 = 4, 9   # M = 36: not a multiple of the (16-aligned) tile
    x2 = jax.random.normal(kx2, (B2, S2, H), dtype=jnp.float32)
    out2 = jax.block_until_ready(mlm_head_forward(x2, params, tm=8, tn=128))
    ref2 = mlm_head_reference(x2, raw)
    assert out2.shape == (B2, S2, V), out2.shape
    err2 = float(jnp.max(jnp.abs(out2 - ref2)))
    assert err2 < 5e-3, err2

    print("KERNEL_OK")
</pallas_src>

<mosaic_0001>
module attributes {stable_mosaic.version = 11 : i64} {
  func.func @fused_kernel(%arg0: i32, %arg1: memref<16x32xbf16, #tpu.memory_space<vmem>>, %arg2: memref<32x32xbf16, #tpu.memory_space<vmem>>, %arg3: memref<1x32xf32, #tpu.memory_space<vmem>>, %arg4: memref<1x32xf32, #tpu.memory_space<vmem>>, %arg5: memref<1x32xf32, #tpu.memory_space<vmem>>, %arg6: memref<32x256xbf16, #tpu.memory_space<vmem>>, %arg7: memref<1x256xf32, #tpu.memory_space<vmem>>, %arg8: memref<16x256xf32, #tpu.memory_space<vmem>>, %arg9: memref<16x32xbf16, #tpu.memory_space<vmem>>) attributes {dimension_semantics = [#tpu.dimension_semantics<arbitrary>], iteration_bounds = array<i64: 1>, scalar_prefetch = 0 : i64, scratch_operands = 1 : i64, tpu.core_type = #tpu.core_type<tc>, window_params = [{pipeline_mode = #tpu.pipeline_mode<synchronous>, transform_indices = @transform_0, window_bounds = array<i64: 16, 32>}, {pipeline_mode = #tpu.pipeline_mode<synchronous>, transform_indices = @transform_1, window_bounds = array<i64: 32, 32>}, {pipeline_mode = #tpu.pipeline_mode<synchronous>, transform_indices = @transform_2, window_bounds = array<i64: 1, 32>}, {pipeline_mode = #tpu.pipeline_mode<synchronous>, transform_indices = @transform_3, window_bounds = array<i64: 1, 32>}, {pipeline_mode = #tpu.pipeline_mode<synchronous>, transform_indices = @transform_4, window_bounds = array<i64: 1, 32>}, {transform_indices = @transform_5, window_bounds = array<i64: 32, 256>}, {transform_indices = @transform_6, window_bounds = array<i64: 1, 256>}, {transform_indices = @transform_7, window_bounds = array<i64: 16, 256>}]} {
    %c0_i32 = arith.constant 0 : i32
    %0 = arith.cmpi eq, %arg0, %c0_i32 : i32
    %1 = arith.extui %0 : i1 to i32
    %c0_i32_0 = arith.constant 0 : i32
    %2 = arith.cmpi ne, %1, %c0_i32_0 : i32
    scf.if %2 {
      %c0_8 = arith.constant 0 : index
      %c0_9 = arith.constant 0 : index
      %10 = vector.load %arg1[%c0_8, %c0_9] : memref<16x32xbf16, #tpu.memory_space<vmem>>, vector<16x32xbf16>
      %c0_10 = arith.constant 0 : index
      %c0_11 = arith.constant 0 : index
      %11 = vector.load %arg2[%c0_10, %c0_11] : memref<32x32xbf16, #tpu.memory_space<vmem>>, vector<32x32xbf16>
      %cst_12 = arith.constant dense<0.000000e+00> : vector<16x32xf32>
      %12 = tpu.matmul %10, %11, %cst_12 {dimension_numbers = #tpu.dot_dimension_numbers<[1], [0], [0], [1], [0, 0, 1, 1], [], []>} : vector<16x32xbf16>, vector<32x32xbf16>, vector<16x32xf32> -> vector<16x32xf32>
      %c0_13 = arith.constant 0 : index
      %c0_14 = arith.constant 0 : index
      %13 = vector.load %arg3[%c0_13, %c0_14] : memref<1x32xf32, #tpu.memory_space<vmem>>, vector<1x32xf32>
      %c0_15 = arith.constant 0 : index
      %c0_16 = arith.constant 0 : index
      %14 = vector.load %arg4[%c0_15, %c0_16] : memref<1x32xf32, #tpu.memory_space<vmem>>, vector<1x32xf32>
      %c0_17 = arith.constant 0 : index
      %c0_18 = arith.constant 0 : index
      %15 = vector.load %arg5[%c0_17, %c0_18] : memref<1x32xf32, #tpu.memory_space<vmem>>, vector<1x32xf32>
      %16 = vector.broadcast %13 : vector<1x32xf32> to vector<16x32xf32>
      %17 = arith.addf %12, %16 : vector<16x32xf32>
      %cst_19 = arith.constant 5.000000e-01 : f32
      %18 = vector.broadcast %cst_19 : f32 to vector<16x32xf32>
      %19 = arith.mulf %18, %17 : vector<16x32xf32>
      %cst_20 = arith.constant 0.707106769 : f32
      %20 = vector.broadcast %cst_20 : f32 to vector<16x32xf32>
      %21 = arith.mulf %17, %20 : vector<16x32xf32>
      %22 = math.erf %21 : vector<16x32xf32>
      %cst_21 = arith.constant 1.000000e+00 : f32
      %23 = vector.broadcast %cst_21 : f32 to vector<16x32xf32>
      %24 = arith.addf %23, %22 : vector<16x32xf32>
      %25 = arith.mulf %19, %24 : vector<16x32xf32>
      %cst_22 = arith.constant dense<0.000000e+00> : vector<16xf32>
      %26 = vector.multi_reduction <add>, %25, %cst_22 [1] : vector<16x32xf32> to vector<16xf32>
      %27 = vector.shape_cast %26 : vector<16xf32> to vector<16x1xf32>
      %cst_23 = arith.constant 3.200000e+01 : f32
      %28 = vector.broadcast %cst_23 : f32 to vector<16x1xf32>
      %29 = arith.divf %27, %28 : vector<16x1xf32>
      %30 = arith.mulf %25, %25 : vector<16x32xf32>
      %cst_24 = arith.constant dense<0.000000e+00> : vector<16xf32>
      %31 = vector.multi_reduction <add>, %30, %cst_24 [1] : vector<16x32xf32> to vector<16xf32>
      %32 = vector.shape_cast %31 : vector<16xf32> to vector<16x1xf32>
      %cst_25 = arith.constant 3.200000e+01 : f32
      %33 = vector.broadcast %cst_25 : f32 to vector<16x1xf32>
      %34 = arith.divf %32, %33 : vector<16x1xf32>
      %35 = arith.mulf %29, %29 : vector<16x1xf32>
      %36 = arith.subf %34, %35 : vector<16x1xf32>
      %cst_26 = arith.constant 0.000000e+00 : f32
      %37 = vector.broadcast %cst_26 : f32 to vector<16x1xf32>
      %38 = arith.maximumf %36, %37 : vector<16x1xf32>
      %39 = vector.broadcast %29 : vector<16x1xf32> to vector<16x32xf32>
      %40 = arith.subf %25, %39 : vector<16x32xf32>
      %cst_27 = arith.constant 9.99999996E-13 : f32
      %41 = vector.broadcast %cst_27 : f32 to vector<16x1xf32>
      %42 = arith.addf %38, %41 : vector<16x1xf32>
      %43 = math.rsqrt %42 : vector<16x1xf32>
      %44 = vector.broadcast %43 : vector<16x1xf32> to vector<16x32xf32>
      %45 = arith.mulf %40, %44 : vector<16x32xf32>
      %46 = vector.broadcast %14 : vector<1x32xf32> to vector<16x32xf32>
      %47 = arith.mulf %45, %46 : vector<16x32xf32>
      %48 = vector.broadcast %15 : vector<1x32xf32> to vector<16x32xf32>
      %49 = arith.addf %47, %48 : vector<16x32xf32>
      %50 = arith.truncf %49 : vector<16x32xf32> to vector<16x32xbf16>
      %c0_28 = arith.constant 0 : index
      %c0_29 = arith.constant 0 : index
      %51 = vector.load %arg9[%c0_28, %c0_29] : memref<16x32xbf16, #tpu.memory_space<vmem>>, vector<16x32xbf16>
      tpu.vector_store %arg9[%c0_28, %c0_29], %50 {strides = array<i32>} : memref<16x32xbf16, #tpu.memory_space<vmem>>, vector<16x32xbf16>,
    } else {
    }
    %c0 = arith.constant 0 : index
    %c0_1 = arith.constant 0 : index
    %3 = vector.load %arg9[%c0, %c0_1] : memref<16x32xbf16, #tpu.memory_space<vmem>>, vector<16x32xbf16>
    %c0_2 = arith.constant 0 : index
    %c0_3 = arith.constant 0 : index
    %4 = vector.load %arg6[%c0_2, %c0_3] : memref<32x256xbf16, #tpu.memory_space<vmem>>, vector<32x256xbf16>
    %cst = arith.constant dense<0.000000e+00> : vector<16x256xf32>
    %5 = tpu.matmul %3, %4, %cst {dimension_numbers = #tpu.dot_dimension_numbers<[1], [0], [0], [1], [0, 0, 1, 1], [], []>} : vector<16x32xbf16>, vector<32x256xbf16>, vector<16x256xf32> -> vector<16x256xf32>
    %c0_4 = arith.constant 0 : index
    %c0_5 = arith.constant 0 : index
    %6 = vector.load %arg7[%c0_4, %c0_5] : memref<1x256xf32, #tpu.memory_space<vmem>>, vector<1x256xf32>
    %7 = vector.broadcast %6 : vector<1x256xf32> to vector<16x256xf32>
    %8 = arith.addf %5, %7 : vector<16x256xf32>
    %c0_6 = arith.constant 0 : index
    %c0_7 = arith.constant 0 : index
    %9 = vector.load %arg8[%c0_6, %c0_7] : memref<16x256xf32, #tpu.memory_space<vmem>>, vector<16x256xf32>
    tpu.vector_store %arg8[%c0_6, %c0_7], %8 {strides = array<i32>} : memref<16x256xf32, #tpu.memory_space<vmem>>, vector<16x256xf32>,
    return
  }
  func.func @transform_0(%arg0: i32) -> (i32, i32) {
    %c0_i32 = arith.constant 0 : i32
    %c0_i32_0 = arith.constant 0 : i32
    %c0_i32_1 = arith.constant 0 : i32
    return %c0_i32, %c0_i32_0 : i32, i32
  }
  func.func @transform_1(%arg0: i32) -> (i32, i32) {
    %c0_i32 = arith.constant 0 : i32
    %c0_i32_0 = arith.constant 0 : i32
    %c0_i32_1 = arith.constant 0 : i32
    return %c0_i32, %c0_i32_0 : i32, i32
  }
  func.func @transform_2(%arg0: i32) -> (i32, i32) {
    %c0_i32 = arith.constant 0 : i32
    %c0_i32_0 = arith.constant 0 : i32
    %c0_i32_1 = arith.constant 0 : i32
    return %c0_i32, %c0_i32_0 : i32, i32
  }
  func.func @transform_3(%arg0: i32) -> (i32, i32) {
    %c0_i32 = arith.constant 0 : i32
    %c0_i32_0 = arith.constant 0 : i32
    %c0_i32_1 = arith.constant 0 : i32
    return %c0_i32, %c0_i32_0 : i32, i32
  }
  func.func @transform_4(%arg0: i32) -> (i32, i32) {
    %c0_i32 = arith.constant 0 : i32
    %c0_i32_0 = arith.constant 0 : i32
    %c0_i32_1 = arith.constant 0 : i32
    return %c0_i32, %c0_i32_0 : i32, i32
  }
  func.func @transform_5(%arg0: i32) -> (i32, i32) {
    %c0_i32 = arith.constant 0 : i32
    %c0_i32_0 = arith.constant 0 : i32
    return %c0_i32, %arg0 : i32, i32
  }
  func.func @transform_6(%arg0: i32) -> (i32, i32) {
    %c0_i32 = arith.constant 0 : i32
    %c0_i32_0 = arith.constant 0 : i32
    return %c0_i32, %arg0 : i32, i32
  }
  func.func @transform_7(%arg0: i32) -> (i32, i32) {
    %c0_i32 = arith.constant 0 : i32
    %c0_i32_0 = arith.constant 0 : i32
    return %c0_i32, %arg0 : i32, i32
  }
}

</mosaic_0001>

<llo_original>
// kernel: tpu_custom_call.1
$region0: #{tpu_custom_call.1}
  #allocation0 [shape = 'u32[]', space=smem, size = 0x4, offset = 0x4, fixed_abs, tag = 'smem constant byte address 0x4 - core index']
  #allocation1 [shape = 'u32[72,128]{1,0:T(1,128)}', space=vmem, size = 0x9000, scoped, tag = 'internal scratch']
  #allocation2 [shape = 'bf16[16,32]{1,0:T(8,128)(2,1)}', space=vmem, size = 0x1000, scoped, tag = 'scratch operand']
  %s0 = inlined_call_operand.hbm [shape: bf16[16,32], index: 0, kind: input, shape index: {}]
  %s1 = inlined_call_operand.hbm [shape: bf16[32,32], index: 1, kind: input, shape index: {}]
  %s2 = inlined_call_operand.vmem [shape: f32[1,32], index: 2, kind: input, shape index: {}]
  %s3 = inlined_call_operand.hbm [shape: f32[1,32], index: 3, kind: input, shape index: {}]
  %s4 = inlined_call_operand.hbm [shape: f32[1,32], index: 4, kind: input, shape index: {}]
  %s5 = inlined_call_operand.hbm [shape: bf16[32,256], index: 5, kind: input, shape index: {}]
  %s6 = inlined_call_operand.vmem [shape: f32[1,256], index: 6, kind: input, shape index: {}]
  %s7 = inlined_call_operand.hbm [shape: f32[16,256], index: 7, kind: output, shape index: {}]
  %s8 = sld [smem:[#allocation0]]
  $region62: #{tpu_custom_call.1} parent=0
    _
  %s10 = ssub.s32 1, %s8
  %s11 = scalar_select 0, %s10, %s8
  $region1: #{tpu_custom_call.1} parent=0
    #allocation3 [shape = 'u8[4096]{0}', space=vmem, size = 0x1000, scoped, tag = 'input window, operand 0, single buffered']
    #allocation4 [shape = 's32[1]{0}', space=sflag, size = 0x4, scoped, tag = 'scoped memory for tpu_custom_call.1']
    #allocation5 [shape = 's32[1]{0}', space=sflag, size = 0x4, scoped, tag = 'scoped memory for tpu_custom_call.1']
    #allocation6 [shape = 'u8[8192]{0}', space=vmem, size = 0x2000, scoped, tag = 'input window, operand 1, single buffered']
    #allocation7 [shape = 's32[1]{0}', space=sflag, size = 0x4, scoped, tag = 'scoped memory for tpu_custom_call.1']
    #allocation8 [shape = 'u8[512]{0}', space=vmem, size = 0x400, scoped, tag = 'input window, operand 3, single buffered']
    #allocation9 [shape = 'u8[512]{0}', space=vmem, size = 0x400, scoped, tag = 'input window, operand 4, single buffered']
    #allocation10 [shape = 's32[1]{0}', space=sflag, size = 0x4, scoped, tag = 'scoped memory for tpu_custom_call.1']
    #allocation11 [shape = 'u8[16384]{0}', space=vmem, size = 0x4000, scoped, tag = 'input window, operand 5, single buffered']
    #allocation12 [shape = 'u8[16384]{0}', space=vmem, size = 0x4000, scoped, tag = 'output window, operand 0, single buffered']
    %12 = vsyncpa [#allocation4], 0
    %13 = vsyncpa [#allocation7], 0
    %14 = vsyncpa [#allocation10], 0
    %15 = vsyncpa [#allocation5], 0
    // Predicated region
    $region2: #{tpu_custom_call.1} parent=1 // pred_check
      _
    $region3: #{tpu_custom_call.1} parent=1 // pred_check_branch
      %17 = sbr.rel (0) target = $region5
    $region4: #{tpu_custom_call.1} parent=1 // pred_region
      %19 = vsyncadd [#allocation4], 0
      %s20 = sshll.u32 %s0, 4
      %s21 = int_to_ptr.hbm [resolvable:$true] %s20
      %s22 = sshll.u32 [#allocation3], 4
      %s23 = int_to_ptr.vmem [resolvable:$true] %s22
      %28 = dma.hbm_to_vmem [thread:$0]  %s21, 128, %s23, [#allocation4], 64, 64, 4
    $region5: #{tpu_custom_call.1} parent=1 // pred_fallthru
      _
    // Predicated region
    $region6: #{tpu_custom_call.1} parent=1 // pred_check
      _
    $region7: #{tpu_custom_call.1} parent=1 // pred_check_branch
      %30 = sbr.rel (0) target = $region9
    $region8: #{tpu_custom_call.1} parent=1 // pred_region
      %32 = vsyncadd [#allocation7], 0
      %s33 = sshll.u32 %s1, 4
      %s34 = int_to_ptr.hbm [resolvable:$true] %s33
      %s35 = sshll.u32 [#allocation6], 4
      %s36 = int_to_ptr.vmem [resolvable:$true] %s35
      %41 = dma.hbm_to_vmem [thread:$0]  %s34, 256, %s36, [#allocation7], 64, 64, 4
    $region9: #{tpu_custom_call.1} parent=1 // pred_fallthru
      _
    // Predicated region
    $region10: #{tpu_custom_call.1} parent=1 // pred_check
      _
    $region11: #{tpu_custom_call.1} parent=1 // pred_check_branch
      %43 = sbr.rel (0) target = $region13
    $region12: #{tpu_custom_call.1} parent=1 // pred_region
      _
    $region13: #{tpu_custom_call.1} parent=1 // pred_fallthru
      _
    // Predicated region
    $region14: #{tpu_custom_call.1} parent=1 // pred_check
      _
    $region15: #{tpu_custom_call.1} parent=1 // pred_check_branch
      %45 = sbr.rel (0) target = $region17
    $region16: #{tpu_custom_call.1} parent=1 // pred_region
      %47 = vsyncadd [#allocation7], 0
      %s49 = sshll.u32 %s3, 4
      %s50 = int_to_ptr.hbm [resolvable:$true] %s49
      %s51 = sshll.u32 [#allocation8], 4
      %s52 = int_to_ptr.vmem [resolvable:$true] %s51
      %54 = dma.hbm_to_vmem [thread:$0]  %s50, 16, %s52, [#allocation7]
    $region17: #{tpu_custom_call.1} parent=1 // pred_fallthru
      _
    // Predicated region
    $region18: #{tpu_custom_call.1} parent=1 // pred_check
      _
    $region19: #{tpu_custom_call.1} parent=1 // pred_check_branch
      %56 = sbr.rel (0) target = $region21
    $region20: #{tpu_custom_call.1} parent=1 // pred_region
      %58 = vsyncadd [#allocation10], 0
      %s60 = sshll.u32 %s4, 4
      %s61 = int_to_ptr.hbm [resolvable:$true] %s60
      %s62 = sshll.u32 [#allocation9], 4
      %s63 = int_to_ptr.vmem [resolvable:$true] %s62
      %65 = dma.hbm_to_vmem [thread:$0]  %s61, 16, %s63, [#allocation10]
    $region21: #{tpu_custom_call.1} parent=1 // pred_fallthru
      _
    // Predicated region
    $region22: #{tpu_custom_call.1} parent=1 // pred_check
      _
    $region23: #{tpu_custom_call.1} parent=1 // pred_check_branch
      %67 = sbr.rel (0) target = $region25
    $region24: #{tpu_custom_call.1} parent=1 // pred_region
      %69 = vsyncadd [#allocation10], 0
      %s70 = sshll.u32 %s5, 4
      %s71 = int_to_ptr.hbm [resolvable:$true] %s70
      %s72 = sshll.u32 [#allocation11], 4
      %s73 = int_to_ptr.vmem [resolvable:$true] %s72
      %78 = dma.hbm_to_vmem [thread:$0]  %s71, 512, %s73, [#allocation10], 128, 128, 8
    $region25: #{tpu_custom_call.1} parent=1 // pred_fallthru
      _
    // Predicated region
    $region26: #{tpu_custom_call.1} parent=1 // pred_check
      _
    $region27: #{tpu_custom_call.1} parent=1 // pred_check_branch
      %80 = sbr.rel (0) target = $region29
    $region28: #{tpu_custom_call.1} parent=1 // pred_region
      _
    $region29: #{tpu_custom_call.1} parent=1 // pred_fallthru
      _
    // Predicated region
    $region30: #{tpu_custom_call.1} parent=1 // pred_check
      _
    $region31: #{tpu_custom_call.1} parent=1 // pred_check_branch
      %82 = sbr.rel (0) target = $region33
    $region32: #{tpu_custom_call.1} parent=1 // pred_region
      %84 = dma.done [#allocation4], 128
    $region33: #{tpu_custom_call.1} parent=1 // pred_fallthru
      _
    // Predicated region
    $region34: #{tpu_custom_call.1} parent=1 // pred_check
      _
    $region35: #{tpu_custom_call.1} parent=1 // pred_check_branch
      %86 = sbr.rel (0) target = $region37
    $region36: #{tpu_custom_call.1} parent=1 // pred_region
      %88 = dma.done [#allocation7], 256
    $region37: #{tpu_custom_call.1} parent=1 // pred_fallthru
      _
    // Predicated region
    $region38: #{tpu_custom_call.1} parent=1 // pred_check
      _
    $region39: #{tpu_custom_call.1} parent=1 // pred_check_branch
      %90 = sbr.rel (0) target = $region41
    $region40: #{tpu_custom_call.1} parent=1 // pred_region
      %92 = dma.done [#allocation7], 16
    $region41: #{tpu_custom_call.1} parent=1 // pred_fallthru
      _
    // Predicated region
    $region42: #{tpu_custom_call.1} parent=1 // pred_check
      _
    $region43: #{tpu_custom_call.1} parent=1 // pred_check_branch
      %94 = sbr.rel (0) target = $region45
    $region44: #{tpu_custom_call.1} parent=1 // pred_region
      %96 = dma.done [#allocation10], 16
    $region45: #{tpu_custom_call.1} parent=1 // pred_fallthru
      _
    // Predicated region
    $region46: #{tpu_custom_call.1} parent=1 // pred_check
      _
    $region47: #{tpu_custom_call.1} parent=1 // pred_check_branch
      %98 = sbr.rel (0) target = $region49
    $region48: #{tpu_custom_call.1} parent=1 // pred_region
      %100 = dma.done [#allocation10], 512
    $region49: #{tpu_custom_call.1} parent=1 // pred_fallthru
      _
    %p102 = scmp.eq.s32.totalorder 0, 0
    // Predicated region
    $region50: #{tpu_custom_call.1} parent=1 // pred_check
      %p103 = pneg %p102
    $region51: #{tpu_custom_call.1} parent=1 // pred_check_branch
      %105 = sbr.rel (%p103) target = $region53
    $region52: #{tpu_custom_call.1} parent=1 // pred_region
      %v106 = vld [vmem:[#allocation3] sm:$0xf]
      %v107 = vld [vmem:[#allocation3 + $0x4] sm:$0xf]
      %v108 = vld [vmem:[#allocation6] sm:$0xf]
      %v109 = vld [vmem:[#allocation6 + $0x4] sm:$0xf]
      %v110 = vld [vmem:[#allocation6 + $0x8] sm:$0xf]
      %v111 = vld [vmem:[#allocation6 + $0xc] sm:$0xf]
      %v112 = vld [vmem:[%s2] sm:$0x1]
      %v113 = vld [vmem:[#allocation8] sm:$0x1]
      %v114 = vld [vmem:[#allocation9] sm:$0x1]
      %v116 = vperm.slane %v112, 0
      %v120 = vunpack.c.l.b16 %v106
      %v121 = vunpack.c.l.b16 %v107
      %v122 = vpack.c.b16 %v121, %v120
      %v127 = vunpack.c.l.b16 %v108
      %v128 = vunpack.c.l.b16 %v109
      %v129 = vunpack.c.l.b16 %v110
      %v130 = vunpack.c.l.b16 %v111
      %v131 = vpack.c.b16 %v128, %v127
      %v132 = vpack.c.b16 %v130, %v129
      %vm135 = vcmask 261120
      %v137 = vsel %vm135, %v122, 0
      %139 = vmatpush.bf16.msra.mxu0 0
      %140 = vmatpush.bf16.msra.mxu0 0
      %141 = vmatpush.bf16.msra.mxu0 0
      %142 = vmatpush.bf16.msra.mxu0 0
      %143 = vmatpush.bf16.msra.mxu0 0
      %144 = vmatpush.bf16.msra.mxu0 0
      %145 = vmatpush.bf16.msra.mxu0 %v132
      %146 = vmatpush.bf16.msra.mxu0 %v131
      %147 = vmatmul.bf16.gmra.mxu0 %v137
      %v148 = vpop.f32.mrf.mxu0
      %v149 = vadd.f32 %v116, %v148
      %v150 = vpop.f32.mrf.mxu0
      %v151 = vadd.f32 %v116, %v150
      %152 = vdwg.mxu0
      %v153 = vmul.f32 %v149, 0.5
      %v154 = vmul.f32 %v151, 0.5
      %v155 = vmul.f32 %v149, 0.70710677
      %v156 = vmul.f32 %v151, 0.70710677
      %v157 = vmul.f32 %v155, %v155
      %v158 = vmin.f32 16.0, %v157
      %v159 = vmul.f32 %v158, 2.1237322e-06
      %v160 = vadd.f32 %v159, 0.00028619796
      %v161 = vmul.f32 %v158, %v160
      %v162 = vadd.f32 %v161, 0.0036580483
      %v163 = vmul.f32 %v158, %v162
      %v164 = vadd.f32 %v163, 0.05243302
      %v165 = vmul.f32 %v158, %v164
      %v166 = vadd.f32 %v165, 0.18741608
      %v167 = vmul.f32 %v158, %v166
      %v168 = vadd.f32 %v167, 1.1283791
      %v169 = vmul.f32 %v155, %v168
      %v170 = vmul.f32 %v158, 3.8918573e-05
      %v171 = vadd.f32 %v170, 0.001143296
      %v172 = vmul.f32 %v158, %v171
      %v173 = vadd.f32 %v172, 0.014752088
      %v174 = vmul.f32 %v158, %v173
      %v175 = vadd.f32 %v174, 0.112945676
      %v176 = vmul.f32 %v158, %v175
      %v177 = vadd.f32 %v176, 0.4994258
      %v178 = vmul.f32 %v158, %v177
      %v179 = vadd.f32 %v178, 1.0
      %v180 = vrcp.pop %v179
      %v181 = vmul.f32 %v179, %v180
      %v182 = vsub.f32 1.0, %v181
      %v183 = vmul.f32 %v180, %v182
      %v184 = vadd.f32 %v180, %v183
      %vm185 = vweird.f32 %v179
      %vm186 = vweird.f32 %v180
      %vm187 = vmor %vm185, %vm186
      %v188 = vsel %vm187, %v180, %v184
      %v189 = vand.u32 2147483647, %v179
      %vm190 = vcmp.eq.f32.partialorder %v189, 8.507059e+37
      %v191 = vand.u32 %v179, 2147483648
      %v192 = vor.u32 1.1754944e-38, %v191
      %v193 = vsel %vm190, %v192, %v188
      %v194 = vmul.f32 %v169, %v193
      %v195 = vmin.f32 %v194, 1.0
      %v196 = vmax.f32 %v195, -1.0
      %v197 = vmul.f32 %v156, %v156
      %v198 = vmin.f32 16.0, %v197
      %v199 = vmul.f32 %v198, 2.1237322e-06
      %v200 = vadd.f32 %v199, 0.00028619796
      %v201 = vmul.f32 %v198, %v200
      %v202 = vadd.f32 %v201, 0.0036580483
      %v203 = vmul.f32 %v198, %v202
      %v204 = vadd.f32 %v203, 0.05243302
      %v205 = vmul.f32 %v198, %v204
      %v206 = vadd.f32 %v205, 0.18741608
      %v207 = vmul.f32 %v198, %v206
      %v208 = vadd.f32 %v207, 1.1283791
      %v209 = vmul.f32 %v156, %v208
      %v210 = vmul.f32 %v198, 3.8918573e-05
      %v211 = vadd.f32 %v210, 0.001143296
      %v212 = vmul.f32 %v198, %v211
      %v213 = vadd.f32 %v212, 0.014752088
      %v214 = vmul.f32 %v198, %v213
      %v215 = vadd.f32 %v214, 0.112945676
      %v216 = vmul.f32 %v198, %v215
      %v217 = vadd.f32 %v216, 0.4994258
      %v218 = vmul.f32 %v198, %v217
      %v219 = vadd.f32 %v218, 1.0
      %v220 = vrcp.pop %v219
      %v221 = vmul.f32 %v219, %v220
      %v222 = vsub.f32 1.0, %v221
      %v223 = vmul.f32 %v220, %v222
      %v224 = vadd.f32 %v220, %v223
      %vm225 = vweird.f32 %v219
      %vm226 = vweird.f32 %v220
      %vm227 = vmor %vm225, %vm226
      %v228 = vsel %vm227, %v220, %v224
      %v229 = vand.u32 2147483647, %v219
      %vm230 = vcmp.eq.f32.partialorder %v229, 8.507059e+37
      %v231 = vand.u32 %v219, 2147483648
      %v232 = vor.u32 1.1754944e-38, %v231
      %v233 = vsel %vm230, %v232, %v228
      %v234 = vmul.f32 %v209, %v233
      %v235 = vmin.f32 %v234, 1.0
      %v236 = vmax.f32 %v235, -1.0
      %v237 = vadd.f32 %v196, 1.0
      %v238 = vadd.f32 %v236, 1.0
      %v239 = vmul.f32 %v153, %v237
      %v240 = vmul.f32 %v154, %v238
      %v241 = vsel %vm135, %v239, 0.0
      %242 = vadd.xlane.f32.xlu0 %v241
      %v243 = vpop.xlane.xlu0 %242
      %v244 = vsel %vm135, %v240, 0.0
      %245 = vadd.xlane.f32.xlu0 %v244
      %v246 = vpop.xlane.xlu0 %245
      %v247 = vrcp.pop 32.0
      %v248 = vmul.f32 32.0, %v247
      %v249 = vsub.f32 1.0, %v248
      %v250 = vmul.f32 %v247, %v249
      %v251 = vadd.f32 %v247, %v250
      %vm252 = vweird.f32 %v247
      %v253 = vsel %vm252, %v247, %v251
      %v254 = vmul.f32 %v243, %v253
      %v255 = vmul.f32 %v246, %v253
      %v256 = vmul.f32 %v239, %v239
      %v257 = vmul.f32 %v240, %v240
      %v258 = vsel %vm135, %v256, 0.0
      %259 = vadd.xlane.f32.xlu0 %v258
      %v260 = vpop.xlane.xlu0 %259
      %v261 = vsel %vm135, %v257, 0.0
      %262 = vadd.xlane.f32.xlu0 %v261
      %v263 = vpop.xlane.xlu0 %262
      %v264 = vmul.f32 %v260, %v253
      %v265 = vmul.f32 %v263, %v253
      %v266 = vmul.f32 %v254, %v254
      %v267 = vmul.f32 %v255, %v255
      %v268 = vsub.f32 %v264, %v266
      %v269 = vsub.f32 %v265, %v267
      %v270 = vmax.f32 %v268, 0.0
      %v271 = vmax.f32 %v269, 0.0
      %v272 = vsub.f32 %v239, %v254
      %v273 = vsub.f32 %v240, %v255
      %v274 = vadd.f32 %v270, 1e-12
      %v275 = vadd.f32 %v271, 1e-12
      %v276 = vrsqrt.pop %v274
      %v277 = vmul.f32 %v276, %v274
      %v278 = vmul.f32 %v277, %v276
      %v279 = vmul.f32 0.5, %v278
      %v280 = vsub.f32 1.5, %v279
      %v281 = vmul.f32 %v276, %v280
      %vm282 = vweird.f32 %v274
      %vm283 = vweird.f32 %v276
      %vm284 = vmor %vm282, %vm283
      %v285 = vsel %vm284, %v276, %v281
      %v286 = vrsqrt.pop %v275
      %v287 = vmul.f32 %v286, %v275
      %v288 = vmul.f32 %v287, %v286
      %v289 = vmul.f32 0.5, %v288
      %v290 = vsub.f32 1.5, %v289
      %v291 = vmul.f32 %v286, %v290
      %vm292 = vweird.f32 %v275
      %vm293 = vweird.f32 %v286
      %vm294 = vmor %vm292, %vm293
      %v295 = vsel %vm294, %v286, %v291
      %v296 = vmul.f32 %v272, %v285
      %v297 = vmul.f32 %v273, %v295
      %v299 = vperm.slane %v113, 0
      %v301 = vmul.f32 %v296, %v299
      %v302 = vmul.f32 %v297, %v299
      %v304 = vperm.slane %v114, 0
      %v306 = vadd.f32 %v301, %v304
      %v307 = vadd.f32 %v302, %v304
      %v308 = vpack.c.bf16 %v306, %v306
      %v309 = vpack.c.bf16 %v307, %v307
      %vm310 = vcmask 257024
      %311 = vst.msk [vmem:[#allocation2] sm:$0xf] %vm310, %v308
      %312 = vst.msk [vmem:[#allocation2 + $0x4] sm:$0xf] %vm310, %v309
    $region53: #{tpu_custom_call.1} parent=1 // pred_fallthru
      _
    %v313 = vld [vmem:[#allocation2] sm:$0xf]
    %v314 = vld [vmem:[#allocation2 + $0x4] sm:$0xf]
    %v315 = vld [vmem:[#allocation11] sm:$0xff]
    %v316 = vld [vmem:[#allocation11 + $0x8] sm:$0xff]
    %v317 = vld [vmem:[#allocation11 + $0x10] sm:$0xff]
    %v318 = vld [vmem:[#allocation11 + $0x18] sm:$0xff]
    %v319 = vld [vmem:[%s6] sm:$0x3]
    %v321 = vperm.slane %v319, 0
    %v322 = vperm.slane %v319, 1
    %v327 = vunpack.c.l.b16 %v313
    %v328 = vunpack.c.l.b16 %v314
    %v329 = vpack.c.b16 %v328, %v327
    %v334 = vunpack.c.l.b16 %v315
    %v335 = vunpack.c.h.b16 %v315
    %v336 = vunpack.c.l.b16 %v316
    %v337 = vunpack.c.h.b16 %v316
    %v338 = vunpack.c.l.b16 %v317
    %v339 = vunpack.c.h.b16 %v317
    %v340 = vunpack.c.l.b16 %v318
    %v341 = vunpack.c.h.b16 %v318
    %v342 = vpack.c.b16 %v336, %v334
    %v343 = vpack.c.b16 %v337, %v335
    %v344 = vpack.c.b16 %v340, %v338
    %v345 = vpack.c.b16 %v341, %v339
    %vm350 = vcmask 261120
    %v352 = vsel %vm350, %v329, 0
    %354 = vmatpush.bf16.msra.mxu0 0
    %355 = vmatpush.bf16.msra.mxu0 0
    %356 = vmatpush.bf16.msra.mxu0 0
    %357 = vmatpush.bf16.msra.mxu0 0
    %358 = vmatpush.bf16.msra.mxu0 0
    %359 = vmatpush.bf16.msra.mxu0 0
    %360 = vmatpush.bf16.msra.mxu0 %v344
    %361 = vmatpush.bf16.msra.mxu0 %v342
    %362 = vmatmul.bf16.gmra.mxu0 %v352
    %v363 = vpop.f32.mrf.mxu0
    %v364 = vadd.f32 %v321, %v363
    %v365 = vpop.f32.mrf.mxu0
    %v366 = vadd.f32 %v321, %v365
    %367 = vdwg.mxu0
    %368 = vmatpush.bf16.msra.mxu0 0
    %369 = vmatpush.bf16.msra.mxu0 0
    %370 = vmatpush.bf16.msra.mxu0 0
    %371 = vmatpush.bf16.msra.mxu0 0
    %372 = vmatpush.bf16.msra.mxu0 0
    %373 = vmatpush.bf16.msra.mxu0 0
    %374 = vmatpush.bf16.msra.mxu0 %v345
    %375 = vmatpush.bf16.msra.mxu0 %v343
    %376 = vmatmul.bf16.gmra.mxu0 %v352
    %v377 = vpop.f32.mrf.mxu0
    %v378 = vadd.f32 %v322, %v377
    %v379 = vpop.f32.mrf.mxu0
    %v380 = vadd.f32 %v322, %v379
    %381 = vdwg.mxu0
    %382 = vst [vmem:[#allocation12] sm:$0xff] %v364
    %383 = vst [vmem:[#allocation12 + $0x8] sm:$0xff] %v378
    %384 = vst [vmem:[#allocation12 + $0x10] sm:$0xff] %v366
    %385 = vst [vmem:[#allocation12 + $0x18] sm:$0xff] %v380
    // Predicated region
    $region54: #{tpu_custom_call.1} parent=1 // pred_check
      _
    $region55: #{tpu_custom_call.1} parent=1 // pred_check_branch
      %387 = sbr.rel (0) target = $region57
    $region56: #{tpu_custom_call.1} parent=1 // pred_region
      %389 = vsyncadd [#allocation5], 0
      %s390 = sshll.u32 [#allocation12], 4
      %s391 = int_to_ptr.vmem [resolvable:$true] %s390
      %s392 = sshll.u32 %s7, 4
      %s393 = int_to_ptr.hbm [resolvable:$true] %s392
      %398 = dma.vmem_to_hbm [thread:$0]  %s391, 512, %s393, [#allocation5], 256, 256, 16
    $region57: #{tpu_custom_call.1} parent=1 // pred_fallthru
      _
    // Predicated region
    $region58: #{tpu_custom_call.1} parent=1 // pred_check
      _
    $region59: #{tpu_custom_call.1} parent=1 // pred_check_branch
      %400 = sbr.rel (0) target = $region61
    $region60: #{tpu_custom_call.1} parent=1 // pred_region
      %402 = dma.done [#allocation5], 512
    $region61: #{tpu_custom_call.1} parent=1 // pred_fallthru
      _
    %403 = vsyncpa [#allocation4], 1
    %404 = vsyncpa [#allocation7], 1
    %405 = vsyncpa [#allocation10], 1
    %406 = vsyncpa [#allocation5], 1

</llo_original>
